<compile_context>
chip_gen: v7x
topology: tpu7x:2x2x1
jax: 0.10.0
libtpu: 0.0.40
codegen_flags: <defaults>
</compile_context>

<pallas_src>
import functools

import jax
import jax.numpy as jnp
from jax.experimental import pallas as pl
from jax.experimental.pallas import tpu as pltpu


def _contrastive_loss_kernel(f_ref, g_ref, out_ref, m_sc, l_sc, diag_sc, fs_sc,
                             *, inv_temp, valid_cols_last):
    i = pl.program_id(0)            # row-tile index   (parallel)
    k = pl.program_id(1)            # kv-tile index    (reduction, innermost / arbitrary)
    nk = pl.num_programs(1)
    tB = f_ref.shape[0]
    tK = g_ref.shape[0]
    r = tB // tK                    # kv tiles spanned by this row tile's diagonal block

    @pl.when(k == 0)
    def _init():
        m_sc[...] = jnp.full_like(m_sc, -jnp.inf)
        l_sc[...] = jnp.zeros_like(l_sc)
        diag_sc[...] = jnp.zeros_like(diag_sc)
        # Fold 1/temperature into the resident features tile once per row tile
        # (B*D multiplies total instead of B^2 per-step multiplies).
        fs_sc[...] = (f_ref[...] * inv_temp).astype(fs_sc.dtype)

    g = g_ref[...]                                               # (tK, D)

    # MXU: contract the last dim of BOTH operands (no transpose of g), f32 acc.
    sim = jax.lax.dot_general(
        fs_sc[...], g,
        dimension_numbers=(((1,), (1,)), ((), ())),
        preferred_element_type=jnp.float32,
    )                                                            # (tB, tK), already /T

    if valid_cols_last is not None:
        # Padding fallback (only compiled in when B is not a multiple of 128):
        # padded kv columns live exclusively in the last kv tile -> mask them.
        col = jax.lax.broadcasted_iota(jnp.int32, sim.shape, 1)
        valid = jnp.where(k == nk - 1, valid_cols_last, tK)
        sim = jnp.where(col < valid, sim, jnp.float32(-1e30))

    # Flash-style online logsumexp over the kv axis.
    m_prev = m_sc[...]
    m_new = jnp.maximum(m_prev, jnp.max(sim, axis=1, keepdims=True))
    alpha = jnp.exp(m_prev - m_new)
    l_sc[...] = alpha * l_sc[...] + jnp.sum(jnp.exp(sim - m_new), axis=1, keepdims=True)
    m_sc[...] = m_new

    # Positive-pair term sim_ii: only in the kv step(s) whose columns overlap
    # this row tile's diagonal block (requires tB % tK == 0, asserted in the
    # wrapper); computed as a rowwise reduce on the resident tiles.
    @pl.when(jnp.logical_and(k >= i * r, k < (i + 1) * r))
    def _diag():
        off = pl.multiple_of(k * tK - i * tB, tK)
        f_sub = fs_sc[pl.ds(off, tK), :].astype(jnp.float32)     # already scaled by 1/T
        diag_sc[pl.ds(off, tK), :] = jnp.sum(
            f_sub * g.astype(jnp.float32), axis=1, keepdims=True)

    @pl.when(k == nk - 1)
    def _finalize():
        # loss_i = logsumexp_j(sim_ij) - sim_ii  ==  -log(exp_pos / row_sum)
        loss = m_sc[...] + jnp.log(l_sc[...]) - diag_sc[...]     # (tB, 1)
        out_ref[...] = loss.T.astype(out_ref.dtype)              # lane-dense (1, tB)


def _vmem_bytes_estimate(tB, tK, D, itemsize):
    in_bufs = 2 * (tB + tK) * D * itemsize      # double-buffered f and g tiles
    scratch = tB * D * itemsize + 3 * tB * 4    # scaled-f scratch + m/l/diag
    out_bufs = 2 * tB * 4                       # lane-dense per-row loss block
    temps = 4 * tB * tK * 4                     # sim / exp(sim) f32 intermediates
    return in_bufs + scratch + out_bufs + temps


def _select_tiles(B_pad, D, itemsize, budget_bytes=40 * 2**20):
    # kv tile: 256 keeps the v6e/v7x 256x256 MXU full; fall back to 128.
    tK = 256 if B_pad % 256 == 0 else 128
    # row tile: the 1/tB lever on HBM re-streaming of g -> as large as the VMEM
    # budget allows (must divide B_pad and be a multiple of tK).
    tB = tK
    for cand in (1024, 768, 512, 256, 128):
        if cand % tK != 0 or B_pad % cand != 0:
            continue
        if _vmem_bytes_estimate(cand, tK, D, itemsize) <= budget_bytes:
            tB = cand
            break
    # Keep >= 2 row tiles (v7x megacore sharding of the "parallel" axis) when we
    # can do so while keeping tiles >= 256 and tB a multiple of tK.
    if B_pad // tB == 1 and tB >= 512 and (tB // 2) % tK == 0:
        tB //= 2
    return tB, tK


def contrastive_loss(features, augmented_features, margin=1.0, temperature=0.5,
                     matmul_dtype=None):
    """Pallas TPU implementation of ContrastiveLoss.forward.

    `margin` is unused in the reference forward pass (kept for API parity).
    """
    del margin  # unused in forward (matches the PyTorch module)
    assert features.shape == augmented_features.shape and features.ndim == 2
    assert features.dtype == augmented_features.dtype
    B, D = features.shape
    inv_temp = float(1.0 / temperature)

    # f32 operands are cast to bf16 for the MXU (f32 accumulation preserved)
    # when the feature dim is large enough for it to matter; small problems
    # (like the self-check below) stay in f32.
    if matmul_dtype is None:
        use_bf16 = (features.dtype == jnp.float32) and (D >= 512)
        matmul_dtype = jnp.bfloat16 if use_bf16 else features.dtype
    features = features.astype(matmul_dtype)
    augmented_features = augmented_features.astype(matmul_dtype)

    # Pad the batch to a multiple of 128 so the tiled / pipelined path is
    # always taken; padded kv columns are masked in-kernel and padded rows are
    # dropped from the mean below.
    B_pad = ((B + 127) // 128) * 128
    if B_pad != B:
        pad = ((0, B_pad - B), (0, 0))
        features = jnp.pad(features, pad)
        augmented_features = jnp.pad(augmented_features, pad)

    itemsize = features.dtype.itemsize
    tB, tK = _select_tiles(B_pad, D, itemsize)
    assert tB % tK == 0 and B_pad % tB == 0 and B_pad % tK == 0

    nk = B_pad // tK
    valid_cols_last = None if B_pad == B else B - (nk - 1) * tK

    vmem_limit = int(min(max(_vmem_bytes_estimate(tB, tK, D, itemsize) * 1.3,
                             32 * 2**20), 64 * 2**20))

    kernel = functools.partial(_contrastive_loss_kernel,
                               inv_temp=inv_temp,
                               valid_cols_last=valid_cols_last)

    per_row = pl.pallas_call(
        kernel,
        out_shape=jax.ShapeDtypeStruct((1, B_pad), jnp.float32),
        grid_spec=pltpu.PrefetchScalarGridSpec(
            num_scalar_prefetch=0,
            grid=(B_pad // tB, nk),
            in_specs=[
                pl.BlockSpec((tB, D), lambda i, k: (i, 0)),   # features row tile (resident over k)
                pl.BlockSpec((tK, D), lambda i, k: (k, 0)),   # augmented kv tile (streamed)
            ],
            out_specs=pl.BlockSpec((1, tB), lambda i, k: (0, i)),  # lane-dense per-row loss
            scratch_shapes=[
                pltpu.VMEM((tB, 1), jnp.float32),      # running row max  m
                pltpu.VMEM((tB, 1), jnp.float32),      # running row sum  l
                pltpu.VMEM((tB, 1), jnp.float32),      # diagonal sim_ii (already / T)
                pltpu.VMEM((tB, D), features.dtype),   # features tile pre-scaled by 1/T
            ],
        ),
        compiler_params=pltpu.CompilerParams(
            dimension_semantics=("parallel", "arbitrary"),
            vmem_limit_bytes=vmem_limit,
        ),
    )(features, augmented_features)

    # Mean over the real (unpadded) rows.
    return jnp.mean(per_row[0, :B])


def _reference_loss(features, augmented_features, temperature=0.5):
    """Direct transcription of the PyTorch forward (for the self-check)."""
    sim = jnp.matmul(features, augmented_features.T,
                     precision=jax.lax.Precision.HIGHEST) / temperature
    exp_sim = jnp.exp(sim)
    B = features.shape[0]
    eye = jnp.eye(B, dtype=bool)
    exp_pos = jnp.sum(jnp.where(eye, exp_sim, 0.0), axis=1, keepdims=True)
    sum_neg = jnp.sum(jnp.where(eye, 0.0, exp_sim), axis=1, keepdims=True)
    return jnp.mean(-jnp.log(exp_pos / (exp_pos + sum_neg)))


def _make_inputs(key, B, D):
    k1, k2 = jax.random.split(key)
    f = jax.random.normal(k1, (B, D), dtype=jnp.float32)
    g = f + 0.1 * jax.random.normal(k2, (B, D), dtype=jnp.float32)
    # L2-normalize rows (standard for contrastive features); keeps the
    # reference's naive exp() in range. The kernel itself is logsumexp-stable
    # even for unnormalized inputs.
    f = f / jnp.linalg.norm(f, axis=1, keepdims=True)
    g = g / jnp.linalg.norm(g, axis=1, keepdims=True)
    return f, g


if __name__ == "__main__":
    # Primary small check (module-typical usage: batch of 8 feature vectors).
    f, g = _make_inputs(jax.random.PRNGKey(0), B=8, D=32)
    loss = jax.block_until_ready(contrastive_loss(f, g, margin=1.0, temperature=0.5))
    ref = _reference_loss(f, g, temperature=0.5)
    assert jnp.allclose(loss, ref, rtol=1e-4, atol=1e-5), (loss, ref)

    # Exercise the padding / column-masking path (B not a multiple of 128).
    f, g = _make_inputs(jax.random.PRNGKey(1), B=200, D=64)
    loss = jax.block_until_ready(contrastive_loss(f, g, temperature=0.5))
    ref = _reference_loss(f, g, temperature=0.5)
    assert jnp.allclose(loss, ref, rtol=2e-3, atol=2e-3), (loss, ref)

    # Exercise the multi-tile path (tB > tK, dynamic diagonal offset, grid > 1).
    f, g = _make_inputs(jax.random.PRNGKey(2), B=1024, D=64)
    loss = jax.block_until_ready(contrastive_loss(f, g, temperature=0.5))
    ref = _reference_loss(f, g, temperature=0.5)
    assert jnp.allclose(loss, ref, rtol=2e-3, atol=2e-3), (loss, ref)

    print("KERNEL_OK")
</pallas_src>

<mosaic_0001>
module attributes {stable_mosaic.version = 11 : i64} {
  func.func @_contrastive_loss_kernel(%arg0: i32, %arg1: i32, %arg2: memref<128x32xf32, #tpu.memory_space<vmem>>, %arg3: memref<128x32xf32, #tpu.memory_space<vmem>>, %arg4: memref<1x128xf32, #tpu.memory_space<vmem>>, %arg5: memref<128x1xf32, #tpu.memory_space<vmem>>, %arg6: memref<128x1xf32, #tpu.memory_space<vmem>>, %arg7: memref<128x1xf32, #tpu.memory_space<vmem>>, %arg8: memref<128x32xf32, #tpu.memory_space<vmem>>) attributes {dimension_semantics = [#tpu.dimension_semantics<parallel>, #tpu.dimension_semantics<arbitrary>], iteration_bounds = array<i64: 1, 1>, scalar_prefetch = 0 : i64, scratch_operands = 4 : i64, tpu.core_type = #tpu.core_type<tc>, window_params = [{transform_indices = @transform_0, window_bounds = array<i64: 128, 32>}, {transform_indices = @transform_1, window_bounds = array<i64: 128, 32>}, {transform_indices = @transform_2, window_bounds = array<i64: 1, 128>}]} {
    %c0_i32 = arith.constant 0 : i32
    %0 = arith.cmpi eq, %arg1, %c0_i32 : i32
    %1 = arith.extui %0 : i1 to i32
    %c0_i32_0 = arith.constant 0 : i32
    %2 = arith.cmpi ne, %1, %c0_i32_0 : i32
    scf.if %2 {
      %cst_21 = arith.constant 0xFF800000 : f32
      %40 = vector.broadcast %cst_21 : f32 to vector<128x1xf32>
      %c0_22 = arith.constant 0 : index
      %c0_23 = arith.constant 0 : index
      %41 = vector.load %arg5[%c0_22, %c0_23] : memref<128x1xf32, #tpu.memory_space<vmem>>, vector<128x1xf32>
      tpu.vector_store %arg5[%c0_22, %c0_23], %40 {strides = array<i32>} : memref<128x1xf32, #tpu.memory_space<vmem>>, vector<128x1xf32>,
      %cst_24 = arith.constant 0.000000e+00 : f32
      %42 = vector.broadcast %cst_24 : f32 to vector<128x1xf32>
      %c0_25 = arith.constant 0 : index
      %c0_26 = arith.constant 0 : index
      %43 = vector.load %arg6[%c0_25, %c0_26] : memref<128x1xf32, #tpu.memory_space<vmem>>, vector<128x1xf32>
      tpu.vector_store %arg6[%c0_25, %c0_26], %42 {strides = array<i32>} : memref<128x1xf32, #tpu.memory_space<vmem>>, vector<128x1xf32>,
      %cst_27 = arith.constant 0.000000e+00 : f32
      %44 = vector.broadcast %cst_27 : f32 to vector<128x1xf32>
      %c0_28 = arith.constant 0 : index
      %c0_29 = arith.constant 0 : index
      %45 = vector.load %arg7[%c0_28, %c0_29] : memref<128x1xf32, #tpu.memory_space<vmem>>, vector<128x1xf32>
      tpu.vector_store %arg7[%c0_28, %c0_29], %44 {strides = array<i32>} : memref<128x1xf32, #tpu.memory_space<vmem>>, vector<128x1xf32>,
      %c0_30 = arith.constant 0 : index
      %c0_31 = arith.constant 0 : index
      %46 = vector.load %arg2[%c0_30, %c0_31] : memref<128x32xf32, #tpu.memory_space<vmem>>, vector<128x32xf32>
      %cst_32 = arith.constant 2.000000e+00 : f32
      %47 = vector.broadcast %cst_32 : f32 to vector<128x32xf32>
      %48 = arith.mulf %46, %47 : vector<128x32xf32>
      %c0_33 = arith.constant 0 : index
      %c0_34 = arith.constant 0 : index
      %49 = vector.load %arg8[%c0_33, %c0_34] : memref<128x32xf32, #tpu.memory_space<vmem>>, vector<128x32xf32>
      tpu.vector_store %arg8[%c0_33, %c0_34], %48 {strides = array<i32>} : memref<128x32xf32, #tpu.memory_space<vmem>>, vector<128x32xf32>,
    } else {
    }
    %c0 = arith.constant 0 : index
    %c0_1 = arith.constant 0 : index
    %3 = vector.load %arg3[%c0, %c0_1] : memref<128x32xf32, #tpu.memory_space<vmem>>, vector<128x32xf32>
    %c0_2 = arith.constant 0 : index
    %c0_3 = arith.constant 0 : index
    %4 = vector.load %arg8[%c0_2, %c0_3] : memref<128x32xf32, #tpu.memory_space<vmem>>, vector<128x32xf32>
    %cst = arith.constant dense<0.000000e+00> : vector<128x128xf32>
    %5 = tpu.matmul %4, %3, %cst {dimension_numbers = #tpu.dot_dimension_numbers<[1], [1], [0], [0], [0, 0, 1, 0], [], []>} : vector<128x32xf32>, vector<128x32xf32>, vector<128x128xf32> -> vector<128x128xf32>
    %6 = tpu.iota {dimensions = array<i32: 1>} : vector<128x128xi32>
    %c0_i32_4 = arith.constant 0 : i32
    %7 = arith.cmpi eq, %arg1, %c0_i32_4 : i32
    %c8_i32 = arith.constant 8 : i32
    %c128_i32 = arith.constant 128 : i32
    %8 = arith.select %7, %c8_i32, %c128_i32 : i32
    %9 = vector.broadcast %8 : i32 to vector<128x128xi32>
    %10 = arith.cmpi slt, %6, %9 : vector<128x128xi32>
    %cst_5 = arith.constant -1.000000e+30 : f32
    %11 = vector.broadcast %cst_5 : f32 to vector<128x128xf32>
    %12 = arith.select %10, %5, %11 : vector<128x128xi1>, vector<128x128xf32>
    %c0_6 = arith.constant 0 : index
    %c0_7 = arith.constant 0 : index
    %13 = vector.load %arg5[%c0_6, %c0_7] : memref<128x1xf32, #tpu.memory_space<vmem>>, vector<128x1xf32>
    %cst_8 = arith.constant dense<0xFF800000> : vector<128xf32>
    %14 = vector.multi_reduction <maximumf>, %12, %cst_8 [1] : vector<128x128xf32> to vector<128xf32>
    %15 = vector.shape_cast %14 : vector<128xf32> to vector<128x1xf32>
    %16 = arith.maximumf %13, %15 : vector<128x1xf32>
    %17 = arith.subf %13, %16 : vector<128x1xf32>
    %18 = math.exp %17 : vector<128x1xf32>
    %c0_9 = arith.constant 0 : index
    %c0_10 = arith.constant 0 : index
    %19 = vector.load %arg6[%c0_9, %c0_10] : memref<128x1xf32, #tpu.memory_space<vmem>>, vector<128x1xf32>
    %20 = arith.mulf %18, %19 : vector<128x1xf32>
    %21 = vector.broadcast %16 : vector<128x1xf32> to vector<128x128xf32>
    %22 = arith.subf %12, %21 : vector<128x128xf32>
    %23 = math.exp %22 : vector<128x128xf32>
    %cst_11 = arith.constant dense<0.000000e+00> : vector<128xf32>
    %24 = vector.multi_reduction <add>, %23, %cst_11 [1] : vector<128x128xf32> to vector<128xf32>
    %25 = vector.shape_cast %24 : vector<128xf32> to vector<128x1xf32>
    %26 = arith.addf %20, %25 : vector<128x1xf32>
    %c0_12 = arith.constant 0 : index
    %c0_13 = arith.constant 0 : index
    %27 = vector.load %arg6[%c0_12, %c0_13] : memref<128x1xf32, #tpu.memory_space<vmem>>, vector<128x1xf32>
    tpu.vector_store %arg6[%c0_12, %c0_13], %26 {strides = array<i32>} : memref<128x1xf32, #tpu.memory_space<vmem>>, vector<128x1xf32>,
    %c0_14 = arith.constant 0 : index
    %c0_15 = arith.constant 0 : index
    %28 = vector.load %arg5[%c0_14, %c0_15] : memref<128x1xf32, #tpu.memory_space<vmem>>, vector<128x1xf32>
    tpu.vector_store %arg5[%c0_14, %c0_15], %16 {strides = array<i32>} : memref<128x1xf32, #tpu.memory_space<vmem>>, vector<128x1xf32>,
    %c1_i32 = arith.constant 1 : i32
    %29 = arith.muli %arg0, %c1_i32 : i32
    %30 = arith.cmpi sge, %arg1, %29 : i32
    %c1_i32_16 = arith.constant 1 : i32
    %31 = arith.addi %arg0, %c1_i32_16 : i32
    %c1_i32_17 = arith.constant 1 : i32
    %32 = arith.muli %31, %c1_i32_17 : i32
    %33 = arith.cmpi slt, %arg1, %32 : i32
    %34 = arith.andi %30, %33 : i1
    %35 = arith.extui %34 : i1 to i32
    %c0_i32_18 = arith.constant 0 : i32
    %36 = arith.cmpi ne, %35, %c0_i32_18 : i32
    scf.if %36 {
      %c128_i32_21 = arith.constant 128 : i32
      %40 = arith.muli %arg1, %c128_i32_21 : i32
      %c128_i32_22 = arith.constant 128 : i32
      %41 = arith.muli %arg0, %c128_i32_22 : i32
      %42 = arith.subi %40, %41 : i32
      %43 = tpu.assume_multiple %42, 128 : i32
      %44 = arith.index_cast %43 : i32 to index
      %c0_23 = arith.constant 0 : index
      %45 = vector.load %arg8[%44, %c0_23] : memref<128x32xf32, #tpu.memory_space<vmem>>, vector<128x32xf32>
      %46 = arith.mulf %45, %3 : vector<128x32xf32>
      %cst_24 = arith.constant dense<0.000000e+00> : vector<128xf32>
      %47 = vector.multi_reduction <add>, %46, %cst_24 [1] : vector<128x32xf32> to vector<128xf32>
      %48 = vector.shape_cast %47 : vector<128xf32> to vector<128x1xf32>
      %49 = arith.index_cast %43 : i32 to index
      %c0_25 = arith.constant 0 : index
      %50 = vector.load %arg7[%49, %c0_25] : memref<128x1xf32, #tpu.memory_space<vmem>>, vector<128x1xf32>
      tpu.vector_store %arg7[%49, %c0_25], %48 {strides = array<i32>} : memref<128x1xf32, #tpu.memory_space<vmem>>, vector<128x1xf32>,
    } else {
    }
    %c0_i32_19 = arith.constant 0 : i32
    %37 = arith.cmpi eq, %arg1, %c0_i32_19 : i32
    %38 = arith.extui %37 : i1 to i32
    %c0_i32_20 = arith.constant 0 : i32
    %39 = arith.cmpi ne, %38, %c0_i32_20 : i32
    scf.if %39 {
      %c0_21 = arith.constant 0 : index
      %c0_22 = arith.constant 0 : index
      %40 = vector.load %arg5[%c0_21, %c0_22] : memref<128x1xf32, #tpu.memory_space<vmem>>, vector<128x1xf32>
      %c0_23 = arith.constant 0 : index
      %c0_24 = arith.constant 0 : index
      %41 = vector.load %arg6[%c0_23, %c0_24] : memref<128x1xf32, #tpu.memory_space<vmem>>, vector<128x1xf32>
      %42 = math.log %41 : vector<128x1xf32>
      %43 = arith.addf %40, %42 : vector<128x1xf32>
      %c0_25 = arith.constant 0 : index
      %c0_26 = arith.constant 0 : index
      %44 = vector.load %arg7[%c0_25, %c0_26] : memref<128x1xf32, #tpu.memory_space<vmem>>, vector<128x1xf32>
      %45 = arith.subf %43, %44 : vector<128x1xf32>
      %46 = tpu.transpose %45, [1, 0] : vector<128x1xf32> -> vector<1x128xf32>
      %c0_27 = arith.constant 0 : index
      %c0_28 = arith.constant 0 : index
      %47 = vector.load %arg4[%c0_27, %c0_28] : memref<1x128xf32, #tpu.memory_space<vmem>>, vector<1x128xf32>
      tpu.vector_store %arg4[%c0_27, %c0_28], %46 {strides = array<i32>} : memref<1x128xf32, #tpu.memory_space<vmem>>, vector<1x128xf32>,
    } else {
    }
    return
  }
  func.func @transform_0(%arg0: i32, %arg1: i32) -> (i32, i32) {
    %c0_i32 = arith.constant 0 : i32
    %c0_i32_0 = arith.constant 0 : i32
    return %arg0, %c0_i32 : i32, i32
  }
  func.func @transform_1(%arg0: i32, %arg1: i32) -> (i32, i32) {
    %c0_i32 = arith.constant 0 : i32
    %c0_i32_0 = arith.constant 0 : i32
    return %arg1, %c0_i32 : i32, i32
  }
  func.func @transform_2(%arg0: i32, %arg1: i32) -> (i32, i32) {
    %c0_i32 = arith.constant 0 : i32
    %c0_i32_0 = arith.constant 0 : i32
    return %c0_i32, %arg0 : i32, i32
  }
}

</mosaic_0001>

<llo_original>
// kernel: tpu_custom_call.1
$region0: #{tpu_custom_call.1}
  #allocation0 [shape = 'u32[]', space=smem, size = 0x4, offset = 0x4, fixed_abs, tag = 'smem constant byte address 0x4 - core index']
  #allocation1 [shape = 'u32[144,128]{1,0:T(1,128)}', space=vmem, size = 0x12000, scoped, tag = 'internal scratch']
  #allocation2 [shape = 'f32[128,1]{1,0:T(8,128)}', space=vmem, size = 0x10000, scoped, tag = 'scratch operand']
  #allocation3 [shape = 'f32[128,1]{1,0:T(8,128)}', space=vmem, size = 0x10000, scoped, tag = 'scratch operand']
  #allocation4 [shape = 'f32[128,1]{1,0:T(8,128)}', space=vmem, size = 0x10000, scoped, tag = 'scratch operand']
  #allocation5 [shape = 'f32[128,32]{1,0:T(8,128)}', space=vmem, size = 0x10000, scoped, tag = 'scratch operand']
  %s0 = inlined_call_operand.vmem [shape: f32[128,32], index: 0, kind: input, shape index: {}]
  %s1 = inlined_call_operand.vmem [shape: f32[128,32], index: 1, kind: input, shape index: {}]
  %s2 = inlined_call_operand.hbm [shape: f32[1,128], index: 2, kind: output, shape index: {}]
  %s3 = sld [smem:[#allocation0]]
  $region30: #{tpu_custom_call.1} parent=0
    _
  %s5 = ssub.s32 1, %s3
  %s6 = scalar_select 0, %s5, %s3
  $region1: #{tpu_custom_call.1} parent=0
    #allocation6 [shape = 'u8[512]{0}', space=vmem, size = 0x400, scoped, tag = 'output window, operand 0, single buffered']
    #allocation7 [shape = 's32[1]{0}', space=sflag, size = 0x4, scoped, tag = 'scoped memory for tpu_custom_call.1']
    %7 = vsyncpa [#allocation7], 0
    // Predicated region
    $region2: #{tpu_custom_call.1} parent=1 // pred_check
      _
    $region3: #{tpu_custom_call.1} parent=1 // pred_check_branch
      %9 = sbr.rel (0) target = $region5
    $region4: #{tpu_custom_call.1} parent=1 // pred_region
      _
    $region5: #{tpu_custom_call.1} parent=1 // pred_fallthru
      _
    // Predicated region
    $region6: #{tpu_custom_call.1} parent=1 // pred_check
      _
    $region7: #{tpu_custom_call.1} parent=1 // pred_check_branch
      %11 = sbr.rel (0) target = $region9
    $region8: #{tpu_custom_call.1} parent=1 // pred_region
      _
    $region9: #{tpu_custom_call.1} parent=1 // pred_fallthru
      _
    %p12 = scmp.eq.s32.totalorder 0, 0
    // Predicated region
    $region10: #{tpu_custom_call.1} parent=1 // pred_check
      %p13 = pneg %p12
    $region11: #{tpu_custom_call.1} parent=1 // pred_check_branch
      %15 = sbr.rel (%p13) target = $region13
    $region12: #{tpu_custom_call.1} parent=1 // pred_region
      %vm16 = vcmask 7168
      %17 = vst.msk [vmem:[#allocation2] sm:$0xff] %vm16, -inf
      %18 = vst.msk [vmem:[#allocation2 + $0x8] sm:$0xff] %vm16, -inf
      %19 = vst.msk [vmem:[#allocation2 + $0x10] sm:$0xff] %vm16, -inf
      %20 = vst.msk [vmem:[#allocation2 + $0x18] sm:$0xff] %vm16, -inf
      %21 = vst.msk [vmem:[#allocation2 + $0x20] sm:$0xff] %vm16, -inf
      %22 = vst.msk [vmem:[#allocation2 + $0x28] sm:$0xff] %vm16, -inf
      %23 = vst.msk [vmem:[#allocation2 + $0x30] sm:$0xff] %vm16, -inf
      %24 = vst.msk [vmem:[#allocation2 + $0x38] sm:$0xff] %vm16, -inf
      %25 = vst.msk [vmem:[#allocation2 + $0x40] sm:$0xff] %vm16, -inf
      %26 = vst.msk [vmem:[#allocation2 + $0x48] sm:$0xff] %vm16, -inf
      %27 = vst.msk [vmem:[#allocation2 + $0x50] sm:$0xff] %vm16, -inf
      %28 = vst.msk [vmem:[#allocation2 + $0x58] sm:$0xff] %vm16, -inf
      %29 = vst.msk [vmem:[#allocation2 + $0x60] sm:$0xff] %vm16, -inf
      %30 = vst.msk [vmem:[#allocation2 + $0x68] sm:$0xff] %vm16, -inf
      %31 = vst.msk [vmem:[#allocation2 + $0x70] sm:$0xff] %vm16, -inf
      %32 = vst.msk [vmem:[#allocation2 + $0x78] sm:$0xff] %vm16, -inf
      %33 = vst.msk [vmem:[#allocation3] sm:$0xff] %vm16, 0.0
      %34 = vst.msk [vmem:[#allocation3 + $0x8] sm:$0xff] %vm16, 0.0
      %35 = vst.msk [vmem:[#allocation3 + $0x10] sm:$0xff] %vm16, 0.0
      %36 = vst.msk [vmem:[#allocation3 + $0x18] sm:$0xff] %vm16, 0.0
      %37 = vst.msk [vmem:[#allocation3 + $0x20] sm:$0xff] %vm16, 0.0
      %38 = vst.msk [vmem:[#allocation3 + $0x28] sm:$0xff] %vm16, 0.0
      %39 = vst.msk [vmem:[#allocation3 + $0x30] sm:$0xff] %vm16, 0.0
      %40 = vst.msk [vmem:[#allocation3 + $0x38] sm:$0xff] %vm16, 0.0
      %41 = vst.msk [vmem:[#allocation3 + $0x40] sm:$0xff] %vm16, 0.0
      %42 = vst.msk [vmem:[#allocation3 + $0x48] sm:$0xff] %vm16, 0.0
      %43 = vst.msk [vmem:[#allocation3 + $0x50] sm:$0xff] %vm16, 0.0
      %44 = vst.msk [vmem:[#allocation3 + $0x58] sm:$0xff] %vm16, 0.0
      %45 = vst.msk [vmem:[#allocation3 + $0x60] sm:$0xff] %vm16, 0.0
      %46 = vst.msk [vmem:[#allocation3 + $0x68] sm:$0xff] %vm16, 0.0
      %47 = vst.msk [vmem:[#allocation3 + $0x70] sm:$0xff] %vm16, 0.0
      %48 = vst.msk [vmem:[#allocation3 + $0x78] sm:$0xff] %vm16, 0.0
      %49 = vst.msk [vmem:[#allocation4] sm:$0xff] %vm16, 0.0
      %50 = vst.msk [vmem:[#allocation4 + $0x8] sm:$0xff] %vm16, 0.0
      %51 = vst.msk [vmem:[#allocation4 + $0x10] sm:$0xff] %vm16, 0.0
      %52 = vst.msk [vmem:[#allocation4 + $0x18] sm:$0xff] %vm16, 0.0
      %53 = vst.msk [vmem:[#allocation4 + $0x20] sm:$0xff] %vm16, 0.0
      %54 = vst.msk [vmem:[#allocation4 + $0x28] sm:$0xff] %vm16, 0.0
      %55 = vst.msk [vmem:[#allocation4 + $0x30] sm:$0xff] %vm16, 0.0
      %56 = vst.msk [vmem:[#allocation4 + $0x38] sm:$0xff] %vm16, 0.0
      %57 = vst.msk [vmem:[#allocation4 + $0x40] sm:$0xff] %vm16, 0.0
      %58 = vst.msk [vmem:[#allocation4 + $0x48] sm:$0xff] %vm16, 0.0
      %59 = vst.msk [vmem:[#allocation4 + $0x50] sm:$0xff] %vm16, 0.0
      %60 = vst.msk [vmem:[#allocation4 + $0x58] sm:$0xff] %vm16, 0.0
      %61 = vst.msk [vmem:[#allocation4 + $0x60] sm:$0xff] %vm16, 0.0
      %62 = vst.msk [vmem:[#allocation4 + $0x68] sm:$0xff] %vm16, 0.0
      %63 = vst.msk [vmem:[#allocation4 + $0x70] sm:$0xff] %vm16, 0.0
      %64 = vst.msk [vmem:[#allocation4 + $0x78] sm:$0xff] %vm16, 0.0
      %v65 = vld [vmem:[%s0] sm:$0xff]
      %v66 = vld [vmem:[%s0 + $0x8] sm:$0xff]
      %v67 = vld [vmem:[%s0 + $0x10] sm:$0xff]
      %v68 = vld [vmem:[%s0 + $0x18] sm:$0xff]
      %v69 = vld [vmem:[%s0 + $0x20] sm:$0xff]
      %v70 = vld [vmem:[%s0 + $0x28] sm:$0xff]
      %v71 = vld [vmem:[%s0 + $0x30] sm:$0xff]
      %v72 = vld [vmem:[%s0 + $0x38] sm:$0xff]
      %v73 = vld [vmem:[%s0 + $0x40] sm:$0xff]
      %v74 = vld [vmem:[%s0 + $0x48] sm:$0xff]
      %v75 = vld [vmem:[%s0 + $0x50] sm:$0xff]
      %v76 = vld [vmem:[%s0 + $0x58] sm:$0xff]
      %v77 = vld [vmem:[%s0 + $0x60] sm:$0xff]
      %v78 = vld [vmem:[%s0 + $0x68] sm:$0xff]
      %v79 = vld [vmem:[%s0 + $0x70] sm:$0xff]
      %v80 = vld [vmem:[%s0 + $0x78] sm:$0xff]
      %v81 = vmul.f32 %v65, 2.0
      %v82 = vmul.f32 %v66, 2.0
      %v83 = vmul.f32 %v67, 2.0
      %v84 = vmul.f32 %v68, 2.0
      %v85 = vmul.f32 %v69, 2.0
      %v86 = vmul.f32 %v70, 2.0
      %v87 = vmul.f32 %v71, 2.0
      %v88 = vmul.f32 %v72, 2.0
      %v89 = vmul.f32 %v73, 2.0
      %v90 = vmul.f32 %v74, 2.0
      %v91 = vmul.f32 %v75, 2.0
      %v92 = vmul.f32 %v76, 2.0
      %v93 = vmul.f32 %v77, 2.0
      %v94 = vmul.f32 %v78, 2.0
      %v95 = vmul.f32 %v79, 2.0
      %v96 = vmul.f32 %v80, 2.0
      %vm97 = vcmask 261120
      %98 = vst.msk [vmem:[#allocation5] sm:$0xff] %vm97, %v81
      %99 = vst.msk [vmem:[#allocation5 + $0x8] sm:$0xff] %vm97, %v82
      %100 = vst.msk [vmem:[#allocation5 + $0x10] sm:$0xff] %vm97, %v83
      %101 = vst.msk [vmem:[#allocation5 + $0x18] sm:$0xff] %vm97, %v84
      %102 = vst.msk [vmem:[#allocation5 + $0x20] sm:$0xff] %vm97, %v85
      %103 = vst.msk [vmem:[#allocation5 + $0x28] sm:$0xff] %vm97, %v86
      %104 = vst.msk [vmem:[#allocation5 + $0x30] sm:$0xff] %vm97, %v87
      %105 = vst.msk [vmem:[#allocation5 + $0x38] sm:$0xff] %vm97, %v88
      %106 = vst.msk [vmem:[#allocation5 + $0x40] sm:$0xff] %vm97, %v89
      %107 = vst.msk [vmem:[#allocation5 + $0x48] sm:$0xff] %vm97, %v90
      %108 = vst.msk [vmem:[#allocation5 + $0x50] sm:$0xff] %vm97, %v91
      %109 = vst.msk [vmem:[#allocation5 + $0x58] sm:$0xff] %vm97, %v92
      %110 = vst.msk [vmem:[#allocation5 + $0x60] sm:$0xff] %vm97, %v93
      %111 = vst.msk [vmem:[#allocation5 + $0x68] sm:$0xff] %vm97, %v94
      %112 = vst.msk [vmem:[#allocation5 + $0x70] sm:$0xff] %vm97, %v95
      %113 = vst.msk [vmem:[#allocation5 + $0x78] sm:$0xff] %vm97, %v96
    $region13: #{tpu_custom_call.1} parent=1 // pred_fallthru
      _
    %v114 = vld [vmem:[%s1] sm:$0xff]
    %v115 = vld [vmem:[%s1 + $0x8] sm:$0xff]
    %v116 = vld [vmem:[%s1 + $0x10] sm:$0xff]
    %v117 = vld [vmem:[%s1 + $0x18] sm:$0xff]
    %v118 = vld [vmem:[%s1 + $0x20] sm:$0xff]
    %v119 = vld [vmem:[%s1 + $0x28] sm:$0xff]
    %v120 = vld [vmem:[%s1 + $0x30] sm:$0xff]
    %v121 = vld [vmem:[%s1 + $0x38] sm:$0xff]
    %v122 = vld [vmem:[%s1 + $0x40] sm:$0xff]
    %v123 = vld [vmem:[%s1 + $0x48] sm:$0xff]
    %v124 = vld [vmem:[%s1 + $0x50] sm:$0xff]
    %v125 = vld [vmem:[%s1 + $0x58] sm:$0xff]
    %v126 = vld [vmem:[%s1 + $0x60] sm:$0xff]
    %v127 = vld [vmem:[%s1 + $0x68] sm:$0xff]
    %v128 = vld [vmem:[%s1 + $0x70] sm:$0xff]
    %v129 = vld [vmem:[%s1 + $0x78] sm:$0xff]
    %v130 = vld [vmem:[#allocation5] sm:$0xff]
    %v131 = vld [vmem:[#allocation5 + $0x8] sm:$0xff]
    %v132 = vld [vmem:[#allocation5 + $0x10] sm:$0xff]
    %v133 = vld [vmem:[#allocation5 + $0x18] sm:$0xff]
    %v134 = vld [vmem:[#allocation5 + $0x20] sm:$0xff]
    %v135 = vld [vmem:[#allocation5 + $0x28] sm:$0xff]
    %v136 = vld [vmem:[#allocation5 + $0x30] sm:$0xff]
    %v137 = vld [vmem:[#allocation5 + $0x38] sm:$0xff]
    %v138 = vld [vmem:[#allocation5 + $0x40] sm:$0xff]
    %v139 = vld [vmem:[#allocation5 + $0x48] sm:$0xff]
    %v140 = vld [vmem:[#allocation5 + $0x50] sm:$0xff]
    %v141 = vld [vmem:[#allocation5 + $0x58] sm:$0xff]
    %v142 = vld [vmem:[#allocation5 + $0x60] sm:$0xff]
    %v143 = vld [vmem:[#allocation5 + $0x68] sm:$0xff]
    %v144 = vld [vmem:[#allocation5 + $0x70] sm:$0xff]
    %v145 = vld [vmem:[#allocation5 + $0x78] sm:$0xff]
    %vm146 = vcmask 261120
    %v148 = vsel %vm146, %v130, 0
    %v151 = vsel %vm146, %v131, 0
    %v154 = vsel %vm146, %v132, 0
    %v157 = vsel %vm146, %v133, 0
    %v160 = vsel %vm146, %v134, 0
    %v163 = vsel %vm146, %v135, 0
    %v166 = vsel %vm146, %v136, 0
    %v169 = vsel %vm146, %v137, 0
    %v172 = vsel %vm146, %v138, 0
    %v175 = vsel %vm146, %v139, 0
    %v178 = vsel %vm146, %v140, 0
    %v181 = vsel %vm146, %v141, 0
    %v184 = vsel %vm146, %v142, 0
    %v187 = vsel %vm146, %v143, 0
    %v190 = vsel %vm146, %v144, 0
    %v193 = vsel %vm146, %v145, 0
    %v196 = vsel %vm146, %v114, 0
    %v199 = vsel %vm146, %v115, 0
    %v202 = vsel %vm146, %v116, 0
    %v205 = vsel %vm146, %v117, 0
    %v208 = vsel %vm146, %v118, 0
    %v211 = vsel %vm146, %v119, 0
    %v214 = vsel %vm146, %v120, 0
    %v217 = vsel %vm146, %v121, 0
    %v220 = vsel %vm146, %v122, 0
    %v223 = vsel %vm146, %v123, 0
    %v226 = vsel %vm146, %v124, 0
    %v229 = vsel %vm146, %v125, 0
    %v232 = vsel %vm146, %v126, 0
    %v235 = vsel %vm146, %v127, 0
    %v238 = vsel %vm146, %v128, 0
    %v241 = vsel %vm146, %v129, 0
    %243 = vmatprep.subr.mxu0 0.0
    %244 = vmatpush1.xpose.msra.mxu0 %v196
    %245 = vmatprep.subr.mxu0 0.0
    %246 = vmatpush1.xpose.msra.mxu0 %v199
    %247 = vmatprep.subr.mxu0 0.0
    %248 = vmatpush1.xpose.msra.mxu0 %v202
    %249 = vmatprep.subr.mxu0 0.0
    %250 = vmatpush1.xpose.msra.mxu0 %v205
    %251 = vmatprep.subr.mxu0 0.0
    %252 = vmatpush1.xpose.msra.mxu0 %v208
    %253 = vmatprep.subr.mxu0 0.0
    %254 = vmatpush1.xpose.msra.mxu0 %v211
    %255 = vmatprep.subr.mxu0 0.0
    %256 = vmatpush1.xpose.msra.mxu0 %v214
    %257 = vmatprep.subr.mxu0 0.0
    %258 = vmatpush1.xpose.msra.mxu0 %v217
    %259 = vmatprep.subr.mxu0 0.0
    %260 = vmatpush1.xpose.msra.mxu0 %v220
    %261 = vmatprep.subr.mxu0 0.0
    %262 = vmatpush1.xpose.msra.mxu0 %v223
    %263 = vmatprep.subr.mxu0 0.0
    %264 = vmatpush1.xpose.msra.mxu0 %v226
    %265 = vmatprep.subr.mxu0 0.0
    %266 = vmatpush1.xpose.msra.mxu0 %v229
    %267 = vmatprep.subr.mxu0 0.0
    %268 = vmatpush1.xpose.msra.mxu0 %v232
    %269 = vmatprep.subr.mxu0 0.0
    %270 = vmatpush1.xpose.msra.mxu0 %v235
    %271 = vmatprep.subr.mxu0 0.0
    %272 = vmatpush1.xpose.msra.mxu0 %v238
    %273 = vmatprep.subr.mxu0 0.0
    %274 = vmatpush1.xpose.msra.mxu0 %v241
    %275 = vmatprep.subr.mxu0 0.0
    %276 = vmatpush1.xpose.msra.mxu0 0.0
    %277 = vmatprep.subr.mxu0 0.0
    %278 = vmatpush1.xpose.msra.mxu0 0.0
    %279 = vmatprep.subr.mxu0 0.0
    %280 = vmatpush1.xpose.msra.mxu0 0.0
    %281 = vmatprep.subr.mxu0 0.0
    %282 = vmatpush1.xpose.msra.mxu0 0.0
    %283 = vmatprep.subr.mxu0 0.0
    %284 = vmatpush1.xpose.msra.mxu0 0.0
    %285 = vmatprep.subr.mxu0 0.0
    %286 = vmatpush1.xpose.msra.mxu0 0.0
    %287 = vmatprep.subr.mxu0 0.0
    %288 = vmatpush1.xpose.msra.mxu0 0.0
    %289 = vmatprep.subr.mxu0 0.0
    %290 = vmatpush1.xpose.msra.mxu0 0.0
    %291 = vmatprep.subr.mxu0 0.0
    %292 = vmatpush1.xpose.msra.mxu0 0.0
    %293 = vmatprep.subr.mxu0 0.0
    %294 = vmatpush1.xpose.msra.mxu0 0.0
    %295 = vmatprep.subr.mxu0 0.0
    %296 = vmatpush1.xpose.msra.mxu0 0.0
    %297 = vmatprep.subr.mxu0 0.0
    %298 = vmatpush1.xpose.msra.mxu0 0.0
    %299 = vmatprep.subr.mxu0 0.0
    %300 = vmatpush1.xpose.msra.mxu0 0.0
    %301 = vmatprep.subr.mxu0 0.0
    %302 = vmatpush1.xpose.msra.mxu0 0.0
    %303 = vmatprep.subr.mxu0 0.0
    %304 = vmatpush1.xpose.msra.mxu0 0.0
    %305 = vmatprep.subr.mxu0 0.0
    %306 = vmatpush1.xpose.msra.mxu0 0.0
    %307 = vmatprep.mubr.f32.mxu0 0.0
    %308 = vmatmul.mubr.f32.gmra.mrb[0].mxu0 %v148
    %v309 = vpop.f32.mrb[0].mxu0
    %v310 = vadd.f32 0.0, %v309
    %v311 = vpop.f32.mrb[0].mxu0
    %312 = vmatprep.mubr.f32.mxu0 0.0
    %313 = vmatmul.mubr.f32.gmra.mrb[0].mxu0 %v151
    %v314 = vpop.f32.mrb[0].mxu0
    %v315 = vadd.f32 0.0, %v314
    %v316 = vpop.f32.mrb[0].mxu0
    %317 = vmatprep.mubr.f32.mxu0 0.0
    %318 = vmatmul.mubr.f32.gmra.mrb[0].mxu0 %v154
    %v319 = vpop.f32.mrb[0].mxu0
    %v320 = vadd.f32 0.0, %v319
    %v321 = vpop.f32.mrb[0].mxu0
    %322 = vmatprep.mubr.f32.mxu0 0.0
    %323 = vmatmul.mubr.f32.gmra.mrb[0].mxu0 %v157
    %v324 = vpop.f32.mrb[0].mxu0
    %v325 = vadd.f32 0.0, %v324
    %v326 = vpop.f32.mrb[0].mxu0
    %327 = vmatprep.mubr.f32.mxu0 0.0
    %328 = vmatmul.mubr.f32.gmra.mrb[0].mxu0 %v160
    %v329 = vpop.f32.mrb[0].mxu0
    %v330 = vadd.f32 0.0, %v329
    %v331 = vpop.f32.mrb[0].mxu0
    %332 = vmatprep.mubr.f32.mxu0 0.0
    %333 = vmatmul.mubr.f32.gmra.mrb[0].mxu0 %v163
    %v334 = vpop.f32.mrb[0].mxu0
    %v335 = vadd.f32 0.0, %v334
    %v336 = vpop.f32.mrb[0].mxu0
    %337 = vmatprep.mubr.f32.mxu0 0.0
    %338 = vmatmul.mubr.f32.gmra.mrb[0].mxu0 %v166
    %v339 = vpop.f32.mrb[0].mxu0
    %v340 = vadd.f32 0.0, %v339
    %v341 = vpop.f32.mrb[0].mxu0
    %342 = vmatprep.mubr.f32.mxu0 0.0
    %343 = vmatmul.mubr.f32.gmra.mrb[0].mxu0 %v169
    %v344 = vpop.f32.mrb[0].mxu0
    %v345 = vadd.f32 0.0, %v344
    %v346 = vpop.f32.mrb[0].mxu0
    %347 = vmatprep.mubr.f32.mxu0 0.0
    %348 = vmatmul.mubr.f32.gmra.mrb[0].mxu0 %v172
    %v349 = vpop.f32.mrb[0].mxu0
    %v350 = vadd.f32 0.0, %v349
    %v351 = vpop.f32.mrb[0].mxu0
    %352 = vmatprep.mubr.f32.mxu0 0.0
    %353 = vmatmul.mubr.f32.gmra.mrb[0].mxu0 %v175
    %v354 = vpop.f32.mrb[0].mxu0
    %v355 = vadd.f32 0.0, %v354
    %v356 = vpop.f32.mrb[0].mxu0
    %357 = vmatprep.mubr.f32.mxu0 0.0
    %358 = vmatmul.mubr.f32.gmra.mrb[0].mxu0 %v178
    %v359 = vpop.f32.mrb[0].mxu0
    %v360 = vadd.f32 0.0, %v359
    %v361 = vpop.f32.mrb[0].mxu0
    %362 = vmatprep.mubr.f32.mxu0 0.0
    %363 = vmatmul.mubr.f32.gmra.mrb[0].mxu0 %v181
    %v364 = vpop.f32.mrb[0].mxu0
    %v365 = vadd.f32 0.0, %v364
    %v366 = vpop.f32.mrb[0].mxu0
    %367 = vmatprep.mubr.f32.mxu0 0.0
    %368 = vmatmul.mubr.f32.gmra.mrb[0].mxu0 %v184
    %v369 = vpop.f32.mrb[0].mxu0
    %v370 = vadd.f32 0.0, %v369
    %v371 = vpop.f32.mrb[0].mxu0
    %372 = vmatprep.mubr.f32.mxu0 0.0
    %373 = vmatmul.mubr.f32.gmra.mrb[0].mxu0 %v187
    %v374 = vpop.f32.mrb[0].mxu0
    %v375 = vadd.f32 0.0, %v374
    %v376 = vpop.f32.mrb[0].mxu0
    %377 = vmatprep.mubr.f32.mxu0 0.0
    %378 = vmatmul.mubr.f32.gmra.mrb[0].mxu0 %v190
    %v379 = vpop.f32.mrb[0].mxu0
    %v380 = vadd.f32 0.0, %v379
    %v381 = vpop.f32.mrb[0].mxu0
    %382 = vmatprep.mubr.f32.mxu0 0.0
    %383 = vmatmul.mubr.f32.gmra.mrb[0].mxu0 %v193
    %v384 = vpop.f32.mrb[0].mxu0
    %v385 = vadd.f32 0.0, %v384
    %v386 = vpop.f32.mrb[0].mxu0
    %387 = vdwg.mxu0
    %v388 = vlaneseq
    %v389 = vand.u32 %v388, 127
    %s390 = scalar_select %p12, 8, 128
    %v391 = vstv %s390
    %vm392 = vcmp.lt.s32.totalorder %v389, %v391
    %v393 = vsel %vm392, %v310, -1e+30
    %v394 = vsel %vm392, %v315, -1e+30
    %v395 = vsel %vm392, %v320, -1e+30
    %v396 = vsel %vm392, %v325, -1e+30
    %v397 = vsel %vm392, %v330, -1e+30
    %v398 = vsel %vm392, %v335, -1e+30
    %v399 = vsel %vm392, %v340, -1e+30
    %v400 = vsel %vm392, %v345, -1e+30
    %v401 = vsel %vm392, %v350, -1e+30
    %v402 = vsel %vm392, %v355, -1e+30
    %v403 = vsel %vm392, %v360, -1e+30
    %v404 = vsel %vm392, %v365, -1e+30
    %v405 = vsel %vm392, %v370, -1e+30
    %v406 = vsel %vm392, %v375, -1e+30
    %v407 = vsel %vm392, %v380, -1e+30
    %v408 = vsel %vm392, %v385, -1e+30
    %v409 = vld [vmem:[#allocation2] sm:$0xff]
    %v410 = vld [vmem:[#allocation2 + $0x8] sm:$0xff]
    %v411 = vld [vmem:[#allocation2 + $0x10] sm:$0xff]
    %v412 = vld [vmem:[#allocation2 + $0x18] sm:$0xff]
    %v413 = vld [vmem:[#allocation2 + $0x20] sm:$0xff]
    %v414 = vld [vmem:[#allocation2 + $0x28] sm:$0xff]
    %v415 = vld [vmem:[#allocation2 + $0x30] sm:$0xff]
    %v416 = vld [vmem:[#allocation2 + $0x38] sm:$0xff]
    %v417 = vld [vmem:[#allocation2 + $0x40] sm:$0xff]
    %v418 = vld [vmem:[#allocation2 + $0x48] sm:$0xff]
    %v419 = vld [vmem:[#allocation2 + $0x50] sm:$0xff]
    %v420 = vld [vmem:[#allocation2 + $0x58] sm:$0xff]
    %v421 = vld [vmem:[#allocation2 + $0x60] sm:$0xff]
    %v422 = vld [vmem:[#allocation2 + $0x68] sm:$0xff]
    %v423 = vld [vmem:[#allocation2 + $0x70] sm:$0xff]
    %v424 = vld [vmem:[#allocation2 + $0x78] sm:$0xff]
    %425 = vmax.xlane.f32.xlu0 %v393
    %v426 = vpop.xlane.xlu0 %425
    %427 = vmax.xlane.f32.xlu0 %v394
    %v428 = vpop.xlane.xlu0 %427
    %429 = vmax.xlane.f32.xlu0 %v395
    %v430 = vpop.xlane.xlu0 %429
    %431 = vmax.xlane.f32.xlu0 %v396
    %v432 = vpop.xlane.xlu0 %431
    %433 = vmax.xlane.f32.xlu0 %v397
    %v434 = vpop.xlane.xlu0 %433
    %435 = vmax.xlane.f32.xlu0 %v398
    %v436 = vpop.xlane.xlu0 %435
    %437 = vmax.xlane.f32.xlu0 %v399
    %v438 = vpop.xlane.xlu0 %437
    %439 = vmax.xlane.f32.xlu0 %v400
    %v440 = vpop.xlane.xlu0 %439
    %441 = vmax.xlane.f32.xlu0 %v401
    %v442 = vpop.xlane.xlu0 %441
    %443 = vmax.xlane.f32.xlu0 %v402
    %v444 = vpop.xlane.xlu0 %443
    %445 = vmax.xlane.f32.xlu0 %v403
    %v446 = vpop.xlane.xlu0 %445
    %447 = vmax.xlane.f32.xlu0 %v404
    %v448 = vpop.xlane.xlu0 %447
    %449 = vmax.xlane.f32.xlu0 %v405
    %v450 = vpop.xlane.xlu0 %449
    %451 = vmax.xlane.f32.xlu0 %v406
    %v452 = vpop.xlane.xlu0 %451
    %453 = vmax.xlane.f32.xlu0 %v407
    %v454 = vpop.xlane.xlu0 %453
    %455 = vmax.xlane.f32.xlu0 %v408
    %v456 = vpop.xlane.xlu0 %455
    %v457 = vmax.f32 %v409, %v426
    %v458 = vmax.f32 %v410, %v428
    %v459 = vmax.f32 %v411, %v430
    %v460 = vmax.f32 %v412, %v432
    %v461 = vmax.f32 %v413, %v434
    %v462 = vmax.f32 %v414, %v436
    %v463 = vmax.f32 %v415, %v438
    %v464 = vmax.f32 %v416, %v440
    %v465 = vmax.f32 %v417, %v442
    %v466 = vmax.f32 %v418, %v444
    %v467 = vmax.f32 %v419, %v446
    %v468 = vmax.f32 %v420, %v448
    %v469 = vmax.f32 %v421, %v450
    %v470 = vmax.f32 %v422, %v452
    %v471 = vmax.f32 %v423, %v454
    %v472 = vmax.f32 %v424, %v456
    %v473 = vsub.f32 %v409, %v457
    %v474 = vsub.f32 %v410, %v458
    %v475 = vsub.f32 %v411, %v459
    %v476 = vsub.f32 %v412, %v460
    %v477 = vsub.f32 %v413, %v461
    %v478 = vsub.f32 %v414, %v462
    %v479 = vsub.f32 %v415, %v463
    %v480 = vsub.f32 %v416, %v464
    %v481 = vsub.f32 %v417, %v465
    %v482 = vsub.f32 %v418, %v466
    %v483 = vsub.f32 %v419, %v467
    %v484 = vsub.f32 %v420, %v468
    %v485 = vsub.f32 %v421, %v469
    %v486 = vsub.f32 %v422, %v470
    %v487 = vsub.f32 %v423, %v471
    %v488 = vsub.f32 %v424, %v472
    %v489 = vmul.f32 %v473, 1.442695
    %v490 = vpow.pop %v489
    %v491 = vmul.f32 %v474, 1.442695
    %v492 = vpow.pop %v491
    %v493 = vmul.f32 %v475, 1.442695
    %v494 = vpow.pop %v493
    %v495 = vmul.f32 %v476, 1.442695
    %v496 = vpow.pop %v495
    %v497 = vmul.f32 %v477, 1.442695
    %v498 = vpow.pop %v497
    %v499 = vmul.f32 %v478, 1.442695
    %v500 = vpow.pop %v499
    %v501 = vmul.f32 %v479, 1.442695
    %v502 = vpow.pop %v501
    %v503 = vmul.f32 %v480, 1.442695
    %v504 = vpow.pop %v503
    %v505 = vmul.f32 %v481, 1.442695
    %v506 = vpow.pop %v505
    %v507 = vmul.f32 %v482, 1.442695
    %v508 = vpow.pop %v507
    %v509 = vmul.f32 %v483, 1.442695
    %v510 = vpow.pop %v509
    %v511 = vmul.f32 %v484, 1.442695
    %v512 = vpow.pop %v511
    %v513 = vmul.f32 %v485, 1.442695
    %v514 = vpow.pop %v513
    %v515 = vmul.f32 %v486, 1.442695
    %v516 = vpow.pop %v515
    %v517 = vmul.f32 %v487, 1.442695
    %v518 = vpow.pop %v517
    %v519 = vmul.f32 %v488, 1.442695
    %v520 = vpow.pop %v519
    %v521 = vld [vmem:[#allocation3] sm:$0xff]
    %v522 = vld [vmem:[#allocation3 + $0x8] sm:$0xff]
    %v523 = vld [vmem:[#allocation3 + $0x10] sm:$0xff]
    %v524 = vld [vmem:[#allocation3 + $0x18] sm:$0xff]
    %v525 = vld [vmem:[#allocation3 + $0x20] sm:$0xff]
    %v526 = vld [vmem:[#allocation3 + $0x28] sm:$0xff]
    %v527 = vld [vmem:[#allocation3 + $0x30] sm:$0xff]
    %v528 = vld [vmem:[#allocation3 + $0x38] sm:$0xff]
    %v529 = vld [vmem:[#allocation3 + $0x40] sm:$0xff]
    %v530 = vld [vmem:[#allocation3 + $0x48] sm:$0xff]
    %v531 = vld [vmem:[#allocation3 + $0x50] sm:$0xff]
    %v532 = vld [vmem:[#allocation3 + $0x58] sm:$0xff]
    %v533 = vld [vmem:[#allocation3 + $0x60] sm:$0xff]
    %v534 = vld [vmem:[#allocation3 + $0x68] sm:$0xff]
    %v535 = vld [vmem:[#allocation3 + $0x70] sm:$0xff]
    %v536 = vld [vmem:[#allocation3 + $0x78] sm:$0xff]
    %v537 = vmul.f32 %v490, %v521
    %v538 = vmul.f32 %v492, %v522
    %v539 = vmul.f32 %v494, %v523
    %v540 = vmul.f32 %v496, %v524
    %v541 = vmul.f32 %v498, %v525
    %v542 = vmul.f32 %v500, %v526
    %v543 = vmul.f32 %v502, %v527
    %v544 = vmul.f32 %v504, %v528
    %v545 = vmul.f32 %v506, %v529
    %v546 = vmul.f32 %v508, %v530
    %v547 = vmul.f32 %v510, %v531
    %v548 = vmul.f32 %v512, %v532
    %v549 = vmul.f32 %v514, %v533
    %v550 = vmul.f32 %v516, %v534
    %v551 = vmul.f32 %v518, %v535
    %v552 = vmul.f32 %v520, %v536
    %554 = vset.pattern.permute.xlu0 0
    %555 = vperm.xlu0 %554, %v457
    %v556 = vpop.permute.xlu0 %555
    %559 = vset.pattern.permute.xlu0 0
    %560 = vperm.xlu0 %559, %v458
    %v561 = vpop.permute.xlu0 %560
    %564 = vset.pattern.permute.xlu0 0
    %565 = vperm.xlu0 %564, %v459
    %v566 = vpop.permute.xlu0 %565
    %569 = vset.pattern.permute.xlu0 0
    %570 = vperm.xlu0 %569, %v460
    %v571 = vpop.permute.xlu0 %570
    %574 = vset.pattern.permute.xlu0 0
    %575 = vperm.xlu0 %574, %v461
    %v576 = vpop.permute.xlu0 %575
    %579 = vset.pattern.permute.xlu0 0
    %580 = vperm.xlu0 %579, %v462
    %v581 = vpop.permute.xlu0 %580
    %584 = vset.pattern.permute.xlu0 0
    %585 = vperm.xlu0 %584, %v463
    %v586 = vpop.permute.xlu0 %585
    %589 = vset.pattern.permute.xlu0 0
    %590 = vperm.xlu0 %589, %v464
    %v591 = vpop.permute.xlu0 %590
    %594 = vset.pattern.permute.xlu0 0
    %595 = vperm.xlu0 %594, %v465
    %v596 = vpop.permute.xlu0 %595
    %599 = vset.pattern.permute.xlu0 0
    %600 = vperm.xlu0 %599, %v466
    %v601 = vpop.permute.xlu0 %600
    %604 = vset.pattern.permute.xlu0 0
    %605 = vperm.xlu0 %604, %v467
    %v606 = vpop.permute.xlu0 %605
    %609 = vset.pattern.permute.xlu0 0
    %610 = vperm.xlu0 %609, %v468
    %v611 = vpop.permute.xlu0 %610
    %614 = vset.pattern.permute.xlu0 0
    %615 = vperm.xlu0 %614, %v469
    %v616 = vpop.permute.xlu0 %615
    %619 = vset.pattern.permute.xlu0 0
    %620 = vperm.xlu0 %619, %v470
    %v621 = vpop.permute.xlu0 %620
    %624 = vset.pattern.permute.xlu0 0
    %625 = vperm.xlu0 %624, %v471
    %v626 = vpop.permute.xlu0 %625
    %629 = vset.pattern.permute.xlu0 0
    %630 = vperm.xlu0 %629, %v472
    %v631 = vpop.permute.xlu0 %630
    %v633 = vsub.f32 %v393, %v556
    %v634 = vsub.f32 %v394, %v561
    %v635 = vsub.f32 %v395, %v566
    %v636 = vsub.f32 %v396, %v571
    %v637 = vsub.f32 %v397, %v576
    %v638 = vsub.f32 %v398, %v581
    %v639 = vsub.f32 %v399, %v586
    %v640 = vsub.f32 %v400, %v591
    %v641 = vsub.f32 %v401, %v596
    %v642 = vsub.f32 %v402, %v601
    %v643 = vsub.f32 %v403, %v606
    %v644 = vsub.f32 %v404, %v611
    %v645 = vsub.f32 %v405, %v616
    %v646 = vsub.f32 %v406, %v621
    %v647 = vsub.f32 %v407, %v626
    %v648 = vsub.f32 %v408, %v631
    %v649 = vmul.f32 %v633, 1.442695
    %v650 = vpow.pop %v649
    %v651 = vmul.f32 %v634, 1.442695
    %v652 = vpow.pop %v651
    %v653 = vmul.f32 %v635, 1.442695
    %v654 = vpow.pop %v653
    %v655 = vmul.f32 %v636, 1.442695
    %v656 = vpow.pop %v655
    %v657 = vmul.f32 %v637, 1.442695
    %v658 = vpow.pop %v657
    %v659 = vmul.f32 %v638, 1.442695
    %v660 = vpow.pop %v659
    %v661 = vmul.f32 %v639, 1.442695
    %v662 = vpow.pop %v661
    %v663 = vmul.f32 %v640, 1.442695
    %v664 = vpow.pop %v663
    %v665 = vmul.f32 %v641, 1.442695
    %v666 = vpow.pop %v665
    %v667 = vmul.f32 %v642, 1.442695
    %v668 = vpow.pop %v667
    %v669 = vmul.f32 %v643, 1.442695
    %v670 = vpow.pop %v669
    %v671 = vmul.f32 %v644, 1.442695
    %v672 = vpow.pop %v671
    %v673 = vmul.f32 %v645, 1.442695
    %v674 = vpow.pop %v673
    %v675 = vmul.f32 %v646, 1.442695
    %v676 = vpow.pop %v675
    %v677 = vmul.f32 %v647, 1.442695
    %v678 = vpow.pop %v677
    %v679 = vmul.f32 %v648, 1.442695
    %v680 = vpow.pop %v679
    %681 = vadd.xlane.f32.xlu0 %v650
    %v682 = vpop.xlane.xlu0 %681
    %683 = vadd.xlane.f32.xlu0 %v652
    %v684 = vpop.xlane.xlu0 %683
    %685 = vadd.xlane.f32.xlu0 %v654
    %v686 = vpop.xlane.xlu0 %685
    %687 = vadd.xlane.f32.xlu0 %v656
    %v688 = vpop.xlane.xlu0 %687
    %689 = vadd.xlane.f32.xlu0 %v658
    %v690 = vpop.xlane.xlu0 %689
    %691 = vadd.xlane.f32.xlu0 %v660
    %v692 = vpop.xlane.xlu0 %691
    %693 = vadd.xlane.f32.xlu0 %v662
    %v694 = vpop.xlane.xlu0 %693
    %695 = vadd.xlane.f32.xlu0 %v664
    %v696 = vpop.xlane.xlu0 %695
    %697 = vadd.xlane.f32.xlu0 %v666
    %v698 = vpop.xlane.xlu0 %697
    %699 = vadd.xlane.f32.xlu0 %v668
    %v700 = vpop.xlane.xlu0 %699
    %701 = vadd.xlane.f32.xlu0 %v670
    %v702 = vpop.xlane.xlu0 %701
    %703 = vadd.xlane.f32.xlu0 %v672
    %v704 = vpop.xlane.xlu0 %703
    %705 = vadd.xlane.f32.xlu0 %v674
    %v706 = vpop.xlane.xlu0 %705
    %707 = vadd.xlane.f32.xlu0 %v676
    %v708 = vpop.xlane.xlu0 %707
    %709 = vadd.xlane.f32.xlu0 %v678
    %v710 = vpop.xlane.xlu0 %709
    %711 = vadd.xlane.f32.xlu0 %v680
    %v712 = vpop.xlane.xlu0 %711
    %v713 = vadd.f32 %v537, %v682
    %v714 = vadd.f32 %v538, %v684
    %v715 = vadd.f32 %v539, %v686
    %v716 = vadd.f32 %v540, %v688
    %v717 = vadd.f32 %v541, %v690
    %v718 = vadd.f32 %v542, %v692
    %v719 = vadd.f32 %v543, %v694
    %v720 = vadd.f32 %v544, %v696
    %v721 = vadd.f32 %v545, %v698
    %v722 = vadd.f32 %v546, %v700
    %v723 = vadd.f32 %v547, %v702
    %v724 = vadd.f32 %v548, %v704
    %v725 = vadd.f32 %v549, %v706
    %v726 = vadd.f32 %v550, %v708
    %v727 = vadd.f32 %v551, %v710
    %v728 = vadd.f32 %v552, %v712
    %vm729 = vcmask 7168
    %730 = vst.msk [vmem:[#allocation3] sm:$0xff] %vm729, %v713
    %731 = vst.msk [vmem:[#allocation3 + $0x8] sm:$0xff] %vm729, %v714
    %732 = vst.msk [vmem:[#allocation3 + $0x10] sm:$0xff] %vm729, %v715
    %733 = vst.msk [vmem:[#allocation3 + $0x18] sm:$0xff] %vm729, %v716
    %734 = vst.msk [vmem:[#allocation3 + $0x20] sm:$0xff] %vm729, %v717
    %735 = vst.msk [vmem:[#allocation3 + $0x28] sm:$0xff] %vm729, %v718
    %736 = vst.msk [vmem:[#allocation3 + $0x30] sm:$0xff] %vm729, %v719
    %737 = vst.msk [vmem:[#allocation3 + $0x38] sm:$0xff] %vm729, %v720
    %738 = vst.msk [vmem:[#allocation3 + $0x40] sm:$0xff] %vm729, %v721
    %739 = vst.msk [vmem:[#allocation3 + $0x48] sm:$0xff] %vm729, %v722
    %740 = vst.msk [vmem:[#allocation3 + $0x50] sm:$0xff] %vm729, %v723
    %741 = vst.msk [vmem:[#allocation3 + $0x58] sm:$0xff] %vm729, %v724
    %742 = vst.msk [vmem:[#allocation3 + $0x60] sm:$0xff] %vm729, %v725
    %743 = vst.msk [vmem:[#allocation3 + $0x68] sm:$0xff] %vm729, %v726
    %744 = vst.msk [vmem:[#allocation3 + $0x70] sm:$0xff] %vm729, %v727
    %745 = vst.msk [vmem:[#allocation3 + $0x78] sm:$0xff] %vm729, %v728
    %746 = vst.msk [vmem:[#allocation2] sm:$0xff] %vm729, %v457
    %747 = vst.msk [vmem:[#allocation2 + $0x8] sm:$0xff] %vm729, %v458
    %748 = vst.msk [vmem:[#allocation2 + $0x10] sm:$0xff] %vm729, %v459
    %749 = vst.msk [vmem:[#allocation2 + $0x18] sm:$0xff] %vm729, %v460
    %750 = vst.msk [vmem:[#allocation2 + $0x20] sm:$0xff] %vm729, %v461
    %751 = vst.msk [vmem:[#allocation2 + $0x28] sm:$0xff] %vm729, %v462
    %752 = vst.msk [vmem:[#allocation2 + $0x30] sm:$0xff] %vm729, %v463
    %753 = vst.msk [vmem:[#allocation2 + $0x38] sm:$0xff] %vm729, %v464
    %754 = vst.msk [vmem:[#allocation2 + $0x40] sm:$0xff] %vm729, %v465
    %755 = vst.msk [vmem:[#allocation2 + $0x48] sm:$0xff] %vm729, %v466
    %756 = vst.msk [vmem:[#allocation2 + $0x50] sm:$0xff] %vm729, %v467
    %757 = vst.msk [vmem:[#allocation2 + $0x58] sm:$0xff] %vm729, %v468
    %758 = vst.msk [vmem:[#allocation2 + $0x60] sm:$0xff] %vm729, %v469
    %759 = vst.msk [vmem:[#allocation2 + $0x68] sm:$0xff] %vm729, %v470
    %760 = vst.msk [vmem:[#allocation2 + $0x70] sm:$0xff] %vm729, %v471
    %761 = vst.msk [vmem:[#allocation2 + $0x78] sm:$0xff] %vm729, %v472
    %p762 = scmp.ge.s32.totalorder 0, 0
    %s763 = sadd.s32 0, 1
    %p764 = scmp.lt.s32.totalorder 0, %s763
    %p765 = pnand %p762, %p764
    %p766 = pneg %p765
    // Predicated region
    $region14: #{tpu_custom_call.1} parent=1 // pred_check
      _
    $region15: #{tpu_custom_call.1} parent=1 // pred_check_branch
      %768 = sbr.rel (%p765) target = $region17
    $region16: #{tpu_custom_call.1} parent=1 // pred_region
      %s769 = smul.u32 0, 128
      %s770 = smul.u32 0, 128
      %s771 = ssub.s32 %s769, %s770
      %s772 = scalar_lea.vmem [#allocation5], %s771
      %v773 = vld [vmem:[%s772] sm:$0xff]
      %v774 = vld [vmem:[%s772 + $0x8] sm:$0xff]
      %v775 = vld [vmem:[%s772 + $0x10] sm:$0xff]
      %v776 = vld [vmem:[%s772 + $0x18] sm:$0xff]
      %v777 = vld [vmem:[%s772 + $0x20] sm:$0xff]
      %v778 = vld [vmem:[%s772 + $0x28] sm:$0xff]
      %v779 = vld [vmem:[%s772 + $0x30] sm:$0xff]
      %v780 = vld [vmem:[%s772 + $0x38] sm:$0xff]
      %v781 = vld [vmem:[%s772 + $0x40] sm:$0xff]
      %v782 = vld [vmem:[%s772 + $0x48] sm:$0xff]
      %v783 = vld [vmem:[%s772 + $0x50] sm:$0xff]
      %v784 = vld [vmem:[%s772 + $0x58] sm:$0xff]
      %v785 = vld [vmem:[%s772 + $0x60] sm:$0xff]
      %v786 = vld [vmem:[%s772 + $0x68] sm:$0xff]
      %v787 = vld [vmem:[%s772 + $0x70] sm:$0xff]
      %v788 = vld [vmem:[%s772 + $0x78] sm:$0xff]
      %v789 = vmul.f32 %v773, %v114
      %v790 = vmul.f32 %v774, %v115
      %v791 = vmul.f32 %v775, %v116
      %v792 = vmul.f32 %v776, %v117
      %v793 = vmul.f32 %v777, %v118
      %v794 = vmul.f32 %v778, %v119
      %v795 = vmul.f32 %v779, %v120
      %v796 = vmul.f32 %v780, %v121
      %v797 = vmul.f32 %v781, %v122
      %v798 = vmul.f32 %v782, %v123
      %v799 = vmul.f32 %v783, %v124
      %v800 = vmul.f32 %v784, %v125
      %v801 = vmul.f32 %v785, %v126
      %v802 = vmul.f32 %v786, %v127
      %v803 = vmul.f32 %v787, %v128
      %v804 = vmul.f32 %v788, %v129
      %v805 = vsel %vm146, %v789, 0.0
      %806 = vadd.xlane.f32.xlu0 %v805
      %v807 = vpop.xlane.xlu0 %806
      %v808 = vsel %vm146, %v790, 0.0
      %809 = vadd.xlane.f32.xlu0 %v808
      %v810 = vpop.xlane.xlu0 %809
      %v811 = vsel %vm146, %v791, 0.0
      %812 = vadd.xlane.f32.xlu0 %v811
      %v813 = vpop.xlane.xlu0 %812
      %v814 = vsel %vm146, %v792, 0.0
      %815 = vadd.xlane.f32.xlu0 %v814
      %v816 = vpop.xlane.xlu0 %815
      %v817 = vsel %vm146, %v793, 0.0
      %818 = vadd.xlane.f32.xlu0 %v817
      %v819 = vpop.xlane.xlu0 %818
      %v820 = vsel %vm146, %v794, 0.0
      %821 = vadd.xlane.f32.xlu0 %v820
      %v822 = vpop.xlane.xlu0 %821
      %v823 = vsel %vm146, %v795, 0.0
      %824 = vadd.xlane.f32.xlu0 %v823
      %v825 = vpop.xlane.xlu0 %824
      %v826 = vsel %vm146, %v796, 0.0
      %827 = vadd.xlane.f32.xlu0 %v826
      %v828 = vpop.xlane.xlu0 %827
      %v829 = vsel %vm146, %v797, 0.0
      %830 = vadd.xlane.f32.xlu0 %v829
      %v831 = vpop.xlane.xlu0 %830
      %v832 = vsel %vm146, %v798, 0.0
      %833 = vadd.xlane.f32.xlu0 %v832
      %v834 = vpop.xlane.xlu0 %833
      %v835 = vsel %vm146, %v799, 0.0
      %836 = vadd.xlane.f32.xlu0 %v835
      %v837 = vpop.xlane.xlu0 %836
      %v838 = vsel %vm146, %v800, 0.0
      %839 = vadd.xlane.f32.xlu0 %v838
      %v840 = vpop.xlane.xlu0 %839
      %v841 = vsel %vm146, %v801, 0.0
      %842 = vadd.xlane.f32.xlu0 %v841
      %v843 = vpop.xlane.xlu0 %842
      %v844 = vsel %vm146, %v802, 0.0
      %845 = vadd.xlane.f32.xlu0 %v844
      %v846 = vpop.xlane.xlu0 %845
      %v847 = vsel %vm146, %v803, 0.0
      %848 = vadd.xlane.f32.xlu0 %v847
      %v849 = vpop.xlane.xlu0 %848
      %v850 = vsel %vm146, %v804, 0.0
      %851 = vadd.xlane.f32.xlu0 %v850
      %v852 = vpop.xlane.xlu0 %851
      %s853 = scalar_lea.vmem [#allocation4], %s771
      %854 = vst.msk [vmem:[%s853] sm:$0xff] %vm729, %v807
      %855 = vst.msk [vmem:[%s853 + $0x8] sm:$0xff] %vm729, %v810
      %856 = vst.msk [vmem:[%s853 + $0x10] sm:$0xff] %vm729, %v813
      %857 = vst.msk [vmem:[%s853 + $0x18] sm:$0xff] %vm729, %v816
      %858 = vst.msk [vmem:[%s853 + $0x20] sm:$0xff] %vm729, %v819
      %859 = vst.msk [vmem:[%s853 + $0x28] sm:$0xff] %vm729, %v822
      %860 = vst.msk [vmem:[%s853 + $0x30] sm:$0xff] %vm729, %v825
      %861 = vst.msk [vmem:[%s853 + $0x38] sm:$0xff] %vm729, %v828
      %862 = vst.msk [vmem:[%s853 + $0x40] sm:$0xff] %vm729, %v831
      %863 = vst.msk [vmem:[%s853 + $0x48] sm:$0xff] %vm729, %v834
      %864 = vst.msk [vmem:[%s853 + $0x50] sm:$0xff] %vm729, %v837
      %865 = vst.msk [vmem:[%s853 + $0x58] sm:$0xff] %vm729, %v840
      %866 = vst.msk [vmem:[%s853 + $0x60] sm:$0xff] %vm729, %v843
      %867 = vst.msk [vmem:[%s853 + $0x68] sm:$0xff] %vm729, %v846
      %868 = vst.msk [vmem:[%s853 + $0x70] sm:$0xff] %vm729, %v849
      %869 = vst.msk [vmem:[%s853 + $0x78] sm:$0xff] %vm729, %v852
    $region17: #{tpu_custom_call.1} parent=1 // pred_fallthru
      _
    // Predicated region
    $region18: #{tpu_custom_call.1} parent=1 // pred_check
      %p870 = pneg %p12
    $region19: #{tpu_custom_call.1} parent=1 // pred_check_branch
      %872 = sbr.rel (%p870) target = $region21
    $region20: #{tpu_custom_call.1} parent=1 // pred_region
      %v873 = vld [vmem:[#allocation2] sm:$0xff]
      %v874 = vld [vmem:[#allocation2 + $0x8] sm:$0xff]
      %v875 = vld [vmem:[#allocation2 + $0x10] sm:$0xff]
      %v876 = vld [vmem:[#allocation2 + $0x18] sm:$0xff]
      %v877 = vld [vmem:[#allocation2 + $0x20] sm:$0xff]
      %v878 = vld [vmem:[#allocation2 + $0x28] sm:$0xff]
      %v879 = vld [vmem:[#allocation2 + $0x30] sm:$0xff]
      %v880 = vld [vmem:[#allocation2 + $0x38] sm:$0xff]
      %v881 = vld [vmem:[#allocation2 + $0x40] sm:$0xff]
      %v882 = vld [vmem:[#allocation2 + $0x48] sm:$0xff]
      %v883 = vld [vmem:[#allocation2 + $0x50] sm:$0xff]
      %v884 = vld [vmem:[#allocation2 + $0x58] sm:$0xff]
      %v885 = vld [vmem:[#allocation2 + $0x60] sm:$0xff]
      %v886 = vld [vmem:[#allocation2 + $0x68] sm:$0xff]
      %v887 = vld [vmem:[#allocation2 + $0x70] sm:$0xff]
      %v888 = vld [vmem:[#allocation2 + $0x78] sm:$0xff]
      %v889 = vld [vmem:[#allocation3] sm:$0xff]
      %v890 = vld [vmem:[#allocation3 + $0x8] sm:$0xff]
      %v891 = vld [vmem:[#allocation3 + $0x10] sm:$0xff]
      %v892 = vld [vmem:[#allocation3 + $0x18] sm:$0xff]
      %v893 = vld [vmem:[#allocation3 + $0x20] sm:$0xff]
      %v894 = vld [vmem:[#allocation3 + $0x28] sm:$0xff]
      %v895 = vld [vmem:[#allocation3 + $0x30] sm:$0xff]
      %v896 = vld [vmem:[#allocation3 + $0x38] sm:$0xff]
      %v897 = vld [vmem:[#allocation3 + $0x40] sm:$0xff]
      %v898 = vld [vmem:[#allocation3 + $0x48] sm:$0xff]
      %v899 = vld [vmem:[#allocation3 + $0x50] sm:$0xff]
      %v900 = vld [vmem:[#allocation3 + $0x58] sm:$0xff]
      %v901 = vld [vmem:[#allocation3 + $0x60] sm:$0xff]
      %v902 = vld [vmem:[#allocation3 + $0x68] sm:$0xff]
      %v903 = vld [vmem:[#allocation3 + $0x70] sm:$0xff]
      %v904 = vld [vmem:[#allocation3 + $0x78] sm:$0xff]
      %v905 = vlog2.pop %v889
      %v906 = vmul.f32 %v905, 0.6931472
      %v907 = vlog2.pop %v890
      %v908 = vmul.f32 %v907, 0.6931472
      %v909 = vlog2.pop %v891
      %v910 = vmul.f32 %v909, 0.6931472
      %v911 = vlog2.pop %v892
      %v912 = vmul.f32 %v911, 0.6931472
      %v913 = vlog2.pop %v893
      %v914 = vmul.f32 %v913, 0.6931472
      %v915 = vlog2.pop %v894
      %v916 = vmul.f32 %v915, 0.6931472
      %v917 = vlog2.pop %v895
      %v918 = vmul.f32 %v917, 0.6931472
      %v919 = vlog2.pop %v896
      %v920 = vmul.f32 %v919, 0.6931472
      %v921 = vlog2.pop %v897
      %v922 = vmul.f32 %v921, 0.6931472
      %v923 = vlog2.pop %v898
      %v924 = vmul.f32 %v923, 0.6931472
      %v925 = vlog2.pop %v899
      %v926 = vmul.f32 %v925, 0.6931472
      %v927 = vlog2.pop %v900
      %v928 = vmul.f32 %v927, 0.6931472
      %v929 = vlog2.pop %v901
      %v930 = vmul.f32 %v929, 0.6931472
      %v931 = vlog2.pop %v902
      %v932 = vmul.f32 %v931, 0.6931472
      %v933 = vlog2.pop %v903
      %v934 = vmul.f32 %v933, 0.6931472
      %v935 = vlog2.pop %v904
      %v936 = vmul.f32 %v935, 0.6931472
      %v937 = vadd.f32 %v873, %v906
      %v938 = vadd.f32 %v874, %v908
      %v939 = vadd.f32 %v875, %v910
      %v940 = vadd.f32 %v876, %v912
      %v941 = vadd.f32 %v877, %v914
      %v942 = vadd.f32 %v878, %v916
      %v943 = vadd.f32 %v879, %v918
      %v944 = vadd.f32 %v880, %v920
      %v945 = vadd.f32 %v881, %v922
      %v946 = vadd.f32 %v882, %v924
      %v947 = vadd.f32 %v883, %v926
      %v948 = vadd.f32 %v884, %v928
      %v949 = vadd.f32 %v885, %v930
      %v950 = vadd.f32 %v886, %v932
      %v951 = vadd.f32 %v887, %v934
      %v952 = vadd.f32 %v888, %v936
      %v953 = vld [vmem:[#allocation4] sm:$0xff]
      %v954 = vld [vmem:[#allocation4 + $0x8] sm:$0xff]
      %v955 = vld [vmem:[#allocation4 + $0x10] sm:$0xff]
      %v956 = vld [vmem:[#allocation4 + $0x18] sm:$0xff]
      %v957 = vld [vmem:[#allocation4 + $0x20] sm:$0xff]
      %v958 = vld [vmem:[#allocation4 + $0x28] sm:$0xff]
      %v959 = vld [vmem:[#allocation4 + $0x30] sm:$0xff]
      %v960 = vld [vmem:[#allocation4 + $0x38] sm:$0xff]
      %v961 = vld [vmem:[#allocation4 + $0x40] sm:$0xff]
      %v962 = vld [vmem:[#allocation4 + $0x48] sm:$0xff]
      %v963 = vld [vmem:[#allocation4 + $0x50] sm:$0xff]
      %v964 = vld [vmem:[#allocation4 + $0x58] sm:$0xff]
      %v965 = vld [vmem:[#allocation4 + $0x60] sm:$0xff]
      %v966 = vld [vmem:[#allocation4 + $0x68] sm:$0xff]
      %v967 = vld [vmem:[#allocation4 + $0x70] sm:$0xff]
      %v968 = vld [vmem:[#allocation4 + $0x78] sm:$0xff]
      %v969 = vsub.f32 %v937, %v953
      %v970 = vsub.f32 %v938, %v954
      %v971 = vsub.f32 %v939, %v955
      %v972 = vsub.f32 %v940, %v956
      %v973 = vsub.f32 %v941, %v957
      %v974 = vsub.f32 %v942, %v958
      %v975 = vsub.f32 %v943, %v959
      %v976 = vsub.f32 %v944, %v960
      %v977 = vsub.f32 %v945, %v961
      %v978 = vsub.f32 %v946, %v962
      %v979 = vsub.f32 %v947, %v963
      %v980 = vsub.f32 %v948, %v964
      %v981 = vsub.f32 %v949, %v965
      %v982 = vsub.f32 %v950, %v966
      %v983 = vsub.f32 %v951, %v967
      %v984 = vsub.f32 %v952, %v968
      %985 = vxpose.xlu0.b32.start [1/16] %v969, 128
      %986 = vxpose.xlu0.b32.cont [2/16] %v970, 128
      %987 = vxpose.xlu0.b32.cont [3/16] %v971, 128
      %988 = vxpose.xlu0.b32.cont [4/16] %v972, 128
      %989 = vxpose.xlu0.b32.cont [5/16] %v973, 128
      %990 = vxpose.xlu0.b32.cont [6/16] %v974, 128
      %991 = vxpose.xlu0.b32.cont [7/16] %v975, 128
      %992 = vxpose.xlu0.b32.cont [8/16] %v976, 128
      %993 = vxpose.xlu0.b32.cont [9/16] %v977, 128
      %994 = vxpose.xlu0.b32.cont [10/16] %v978, 128
      %995 = vxpose.xlu0.b32.cont [11/16] %v979, 128
      %996 = vxpose.xlu0.b32.cont [12/16] %v980, 128
      %997 = vxpose.xlu0.b32.cont [13/16] %v981, 128
      %998 = vxpose.xlu0.b32.cont [14/16] %v982, 128
      %999 = vxpose.xlu0.b32.cont [15/16] %v983, 128
      %1000 = vxpose.xlu0.b32.end [16/16] %v984, 128
      %v1001 = vpop.trf.xlu0
      %v1002 = vpop.trf.xlu0
      %v1003 = vpop.trf.xlu0
      %v1004 = vpop.trf.xlu0
      %v1005 = vpop.trf.xlu0
      %v1006 = vpop.trf.xlu0
      %v1007 = vpop.trf.xlu0
      %v1008 = vpop.trf.xlu0
      %v1009 = vpop.trf.xlu0
      %v1010 = vpop.trf.xlu0
      %v1011 = vpop.trf.xlu0
      %v1012 = vpop.trf.xlu0
      %v1013 = vpop.trf.xlu0
      %v1014 = vpop.trf.xlu0
      %v1015 = vpop.trf.xlu0
      %v1016 = vpop.trf.xlu0
      %1017 = vst [vmem:[#allocation6] sm:$0x1] %v1001
    $region21: #{tpu_custom_call.1} parent=1 // pred_fallthru
      _
    // Predicated region
    $region22: #{tpu_custom_call.1} parent=1 // pred_check
      _
    $region23: #{tpu_custom_call.1} parent=1 // pred_check_branch
      %1019 = sbr.rel (0) target = $region25
    $region24: #{tpu_custom_call.1} parent=1 // pred_region
      %s1021 = ssub.s32 16, 16
      %1022 = vsyncadd [#allocation7], %s1021
      %s1024 = sshll.u32 [#allocation6], 4
      %s1025 = int_to_ptr.vmem [resolvable:$true] %s1024
      %1027 = dma.vmem_to_hbm [thread:$0]  %s1025, 16, %s2, [#allocation7]
    $region25: #{tpu_custom_call.1} parent=1 // pred_fallthru
      _
    // Predicated region
    $region26: #{tpu_custom_call.1} parent=1 // pred_check
      _
    $region27: #{tpu_custom_call.1} parent=1 // pred_check_branch
      %1029 = sbr.rel (0) target = $region29
    $region28: #{tpu_custom_call.1} parent=1 // pred_region
      %1030 = dma.done [#allocation7], 16
    $region29: #{tpu_custom_call.1} parent=1 // pred_fallthru
      _
    %1031 = vsyncpa [#allocation7], 1

</llo_original>
